<compile_context>
chip_gen: v6e
topology: v6e:2x2x1
jax: 0.10.0
libtpu: 0.0.40
codegen_flags: <defaults>
</compile_context>

<pallas_src>
import functools

import jax
import jax.numpy as jnp
from jax.experimental import pallas as pl
from jax.experimental.pallas import tpu as pltpu

LANE = 128
SUBLANE = 8
CHUNK_R = 256                      # rows per in-kernel accumulation chunk (128 KiB f32)
MAX_TILE_R = 4096                  # 4096*128*4B = 2 MiB per input per buffer
PAD_LOGIT = -1.0e4                 # sigmoid(PAD_LOGIT) == 0 -> padded elems contribute 0
VMEM_LIMIT = 48 * 1024 * 1024


def _round_up(a, b):
    return ((a + b - 1) // b) * b


def _dice_bce_kernel(x_ref, t_ref, out_ref, *, tile_r, chunk_r, valid_rows, need_mask):
    num_chunks = tile_r // chunk_r
    sub = chunk_r // SUBLANE

    if need_mask:
        # Hoisted out of the loop (JAX does not CSE broadcast_in_dim).
        row_iota = jax.lax.broadcasted_iota(jnp.int32, (chunk_r, LANE), 0)
        tile_row0 = pl.program_id(0) * tile_r

    def vsum(a):
        # (chunk_r, 128) -> (chunk_r//8, 8, 128); reduce leading (vreg) axis.
        # Pure VPU adds; cross-sublane/lane reduction is deferred to the wrapper.
        return jnp.sum(a.reshape(sub, SUBLANE, LANE), axis=0)

    def body(ci, carry):
        inter_acc, p_acc, t_acc, bce_acc = carry
        r0 = pl.multiple_of(ci * chunk_r, chunk_r)
        x = x_ref[pl.ds(r0, chunk_r), :].astype(jnp.float32)
        t = t_ref[pl.ds(r0, chunk_r), :].astype(jnp.float32)

        if need_mask:
            # Rows >= valid_rows only exist in the (clipped) last tile; their VMEM
            # contents are unspecified, so force them to the zero-contribution
            # sentinel. where() does not propagate NaN/Inf from the dead branch.
            valid = (row_iota + (tile_row0 + r0)) < valid_rows
            x = jnp.where(valid, x, PAD_LOGIT)
            t = jnp.where(valid, t, 0.0)

        # Softplus / log-sigmoid identity (one exp + one log + one divide):
        #   e        = exp(-|x|)
        #   p        = sigmoid(x) = where(x>=0, 1, e) / (1 + e)
        #   log p    = -(log(1+e) + max(-x, 0))
        #   log(1-p) = -(log(1+e) + max( x, 0))
        # Logs clamped at -100 to match torch.nn.functional.binary_cross_entropy.
        # (log(1+e) instead of log1p(e): guaranteed Mosaic lowering; abs error
        #  < ~1e-7 per element, irrelevant at the loss level.)
        e = jnp.exp(-jnp.abs(x))
        inv = 1.0 / (1.0 + e)
        lp1e = jnp.log(1.0 + e)
        p = jnp.where(x >= 0.0, inv, e * inv)
        log_p = jnp.maximum(-(lp1e + jnp.maximum(-x, 0.0)), -100.0)
        log_1mp = jnp.maximum(-(lp1e + jnp.maximum(x, 0.0)), -100.0)
        bce = -(t * log_p + (1.0 - t) * log_1mp)

        return (inter_acc + vsum(p * t),   # intersection partial
                p_acc + vsum(p),           # sum(sigmoid(x)) partial
                t_acc + vsum(t),           # sum(targets) partial
                bce_acc + vsum(bce))       # sum(bce terms) partial

    zeros = jnp.zeros((SUBLANE, LANE), jnp.float32)
    inter_acc, p_acc, t_acc, bce_acc = jax.lax.fori_loop(
        0, num_chunks, body, (zeros, zeros, zeros, zeros))

    out_ref[0, 0, :, :] = inter_acc
    out_ref[0, 1, :, :] = p_acc
    out_ref[0, 2, :, :] = t_acc
    out_ref[0, 3, :, :] = bce_acc


def dice_bce_loss(inputs, targets, smooth=1.0):
    """Pallas implementation of DiceBCELoss.forward(inputs, targets, smooth)."""
    x = inputs.reshape(-1)
    t = targets.reshape(-1)
    n = x.shape[0]

    # dtype-aware packed-sublane multiple (8 for f32, 16 for bf16/f16, 32 for 8-bit).
    def _sub_mult(dt):
        return max(SUBLANE, 32 // jnp.dtype(dt).itemsize)

    sub_mult = max(_sub_mult(x.dtype), _sub_mult(t.dtype))

    rows = pl.cdiv(n, LANE)
    rows_aligned = _round_up(rows, sub_mult)

    # Minimal sentinel pad only when n itself is not lane/sublane aligned
    # (the Pallas tile edge is handled by the in-kernel row mask, not padding).
    pad = rows_aligned * LANE - n
    if pad:
        x = jnp.pad(x, (0, pad), constant_values=PAD_LOGIT)
        t = jnp.pad(t, (0, pad))
    x2 = x.reshape(rows_aligned, LANE)
    t2 = t.reshape(rows_aligned, LANE)

    # Tile selection: whole problem in one chunk when tiny; otherwise 256-row
    # chunks inside tiles of up to 4096 rows, with >= 2 grid steps for
    # medium/large inputs so both v7x TensorCores get work.
    if rows_aligned <= CHUNK_R:
        tile_r = rows_aligned
        chunk_r = rows_aligned
    else:
        chunk_r = CHUNK_R
        half = _round_up(pl.cdiv(rows_aligned, 2), chunk_r)
        tile_r = min(MAX_TILE_R, half)
    num_tiles = pl.cdiv(rows_aligned, tile_r)
    need_mask = (rows_aligned % tile_r) != 0

    kernel = functools.partial(
        _dice_bce_kernel,
        tile_r=tile_r, chunk_r=chunk_r,
        valid_rows=rows_aligned, need_mask=need_mask)

    partials = pl.pallas_call(
        kernel,
        out_shape=jax.ShapeDtypeStruct((num_tiles, 4, SUBLANE, LANE), jnp.float32),
        grid_spec=pltpu.PrefetchScalarGridSpec(
            num_scalar_prefetch=0,
            grid=(num_tiles,),
            in_specs=[
                pl.BlockSpec((tile_r, LANE), lambda i: (i, 0)),
                pl.BlockSpec((tile_r, LANE), lambda i: (i, 0)),
            ],
            out_specs=pl.BlockSpec((1, 4, SUBLANE, LANE), lambda i: (i, 0, 0, 0)),
        ),
        compiler_params=pltpu.CompilerParams(
            dimension_semantics=("parallel",),
            vmem_limit_bytes=VMEM_LIMIT,
        ),
    )(x2, t2)

    # Tiny final reduction + loss formula outside the kernel.
    sums = jnp.sum(partials, axis=(0, 2, 3))  # (4,)
    inter, p_sum, t_sum, bce_sum = sums[0], sums[1], sums[2], sums[3]
    dice_loss = 1.0 - (2.0 * inter + smooth) / (p_sum + t_sum + smooth)
    bce_mean = bce_sum / jnp.float32(n)
    return bce_mean + dice_loss


def _reference(inputs, targets, smooth=1.0):
    p = jax.nn.sigmoid(inputs.reshape(-1).astype(jnp.float32))
    t = targets.reshape(-1).astype(jnp.float32)
    inter = jnp.sum(p * t)
    dice = 1.0 - (2.0 * inter + smooth) / (jnp.sum(p) + jnp.sum(t) + smooth)
    bce = jnp.mean(
        -(t * jnp.maximum(jnp.log(p), -100.0)
          + (1.0 - t) * jnp.maximum(jnp.log(1.0 - p), -100.0))
    )
    return bce + dice


if __name__ == "__main__":
    key = jax.random.PRNGKey(0)
    k1, k2 = jax.random.split(key)
    B, C, H, W = 2, 4, 16, 16
    logits = jax.random.normal(k1, (B, C, H, W), dtype=jnp.float32)
    targets = (jax.random.uniform(k2, (B, C, H, W)) > 0.5).astype(jnp.float32)

    loss = jax.block_until_ready(dice_bce_loss(logits, targets, smooth=1.0))
    ref = jax.block_until_ready(_reference(logits, targets, smooth=1.0))
    assert abs(float(loss) - float(ref)) < 1e-4, (float(loss), float(ref))
    print("KERNEL_OK")
</pallas_src>

<mosaic_0001>
module attributes {stable_mosaic.version = 11 : i64} {
  func.func @_dice_bce_kernel(%arg0: i32, %arg1: memref<16x128xf32, #tpu.memory_space<vmem>>, %arg2: memref<16x128xf32, #tpu.memory_space<vmem>>, %arg3: memref<1x4x8x128xf32, #tpu.memory_space<vmem>>) attributes {dimension_semantics = [#tpu.dimension_semantics<parallel>], iteration_bounds = array<i64: 1>, scalar_prefetch = 0 : i64, scratch_operands = 0 : i64, tpu.core_type = #tpu.core_type<tc>, window_params = [{transform_indices = @transform_0, window_bounds = array<i64: 16, 128>}, {transform_indices = @transform_1, window_bounds = array<i64: 16, 128>}, {transform_indices = @transform_2, window_bounds = array<i64: 1, 4, 8, 128>}]} {
    %cst = arith.constant 0.000000e+00 : f32
    %0 = vector.broadcast %cst : f32 to vector<8x128xf32>
    %c0_i32 = arith.constant 0 : i32
    %c16_i32 = arith.constant 16 : i32
    %1 = arith.muli %c0_i32, %c16_i32 : i32
    %2 = tpu.assume_multiple %1, 16 : i32
    %3 = arith.index_cast %2 : i32 to index
    %c0 = arith.constant 0 : index
    %4 = vector.load %arg1[%3, %c0] : memref<16x128xf32, #tpu.memory_space<vmem>>, vector<16x128xf32>
    %5 = arith.index_cast %2 : i32 to index
    %c0_0 = arith.constant 0 : index
    %6 = vector.load %arg2[%5, %c0_0] : memref<16x128xf32, #tpu.memory_space<vmem>>, vector<16x128xf32>
    %7 = math.absf %4 : vector<16x128xf32>
    %cst_1 = arith.constant 0.000000e+00 : f32
    %8 = vector.broadcast %cst_1 : f32 to vector<16x128xf32>
    %9 = arith.subf %8, %7 : vector<16x128xf32>
    %10 = math.exp %9 : vector<16x128xf32>
    %cst_2 = arith.constant 1.000000e+00 : f32
    %11 = vector.broadcast %cst_2 : f32 to vector<16x128xf32>
    %12 = arith.addf %11, %10 : vector<16x128xf32>
    %cst_3 = arith.constant 1.000000e+00 : f32
    %13 = vector.broadcast %cst_3 : f32 to vector<16x128xf32>
    %14 = arith.divf %13, %12 : vector<16x128xf32>
    %cst_4 = arith.constant 1.000000e+00 : f32
    %15 = vector.broadcast %cst_4 : f32 to vector<16x128xf32>
    %16 = arith.addf %15, %10 : vector<16x128xf32>
    %17 = math.log %16 : vector<16x128xf32>
    %cst_5 = arith.constant 0.000000e+00 : f32
    %18 = vector.broadcast %cst_5 : f32 to vector<16x128xf32>
    %19 = arith.cmpf oge, %4, %18 : vector<16x128xf32>
    %20 = arith.mulf %10, %14 : vector<16x128xf32>
    %21 = arith.select %19, %14, %20 : vector<16x128xi1>, vector<16x128xf32>
    %cst_6 = arith.constant 0.000000e+00 : f32
    %22 = vector.broadcast %cst_6 : f32 to vector<16x128xf32>
    %23 = arith.subf %22, %4 : vector<16x128xf32>
    %cst_7 = arith.constant 0.000000e+00 : f32
    %24 = vector.broadcast %cst_7 : f32 to vector<16x128xf32>
    %25 = arith.maximumf %23, %24 : vector<16x128xf32>
    %26 = arith.addf %17, %25 : vector<16x128xf32>
    %cst_8 = arith.constant 0.000000e+00 : f32
    %27 = vector.broadcast %cst_8 : f32 to vector<16x128xf32>
    %28 = arith.subf %27, %26 : vector<16x128xf32>
    %cst_9 = arith.constant -1.000000e+02 : f32
    %29 = vector.broadcast %cst_9 : f32 to vector<16x128xf32>
    %30 = arith.maximumf %28, %29 : vector<16x128xf32>
    %cst_10 = arith.constant 0.000000e+00 : f32
    %31 = vector.broadcast %cst_10 : f32 to vector<16x128xf32>
    %32 = arith.maximumf %4, %31 : vector<16x128xf32>
    %33 = arith.addf %17, %32 : vector<16x128xf32>
    %cst_11 = arith.constant 0.000000e+00 : f32
    %34 = vector.broadcast %cst_11 : f32 to vector<16x128xf32>
    %35 = arith.subf %34, %33 : vector<16x128xf32>
    %cst_12 = arith.constant -1.000000e+02 : f32
    %36 = vector.broadcast %cst_12 : f32 to vector<16x128xf32>
    %37 = arith.maximumf %35, %36 : vector<16x128xf32>
    %38 = arith.mulf %6, %30 : vector<16x128xf32>
    %cst_13 = arith.constant 1.000000e+00 : f32
    %39 = vector.broadcast %cst_13 : f32 to vector<16x128xf32>
    %40 = arith.subf %39, %6 : vector<16x128xf32>
    %41 = arith.mulf %40, %37 : vector<16x128xf32>
    %42 = arith.addf %38, %41 : vector<16x128xf32>
    %cst_14 = arith.constant 0.000000e+00 : f32
    %43 = vector.broadcast %cst_14 : f32 to vector<16x128xf32>
    %44 = arith.subf %43, %42 : vector<16x128xf32>
    %45 = arith.mulf %21, %6 : vector<16x128xf32>
    %46 = vector.shape_cast %45 : vector<16x128xf32> to vector<2x8x128xf32>
    %cst_15 = arith.constant dense<0.000000e+00> : vector<8x128xf32>
    %47 = vector.multi_reduction <add>, %46, %cst_15 [0] : vector<2x8x128xf32> to vector<8x128xf32>
    %48 = arith.addf %0, %47 : vector<8x128xf32>
    %49 = vector.shape_cast %21 : vector<16x128xf32> to vector<2x8x128xf32>
    %cst_16 = arith.constant dense<0.000000e+00> : vector<8x128xf32>
    %50 = vector.multi_reduction <add>, %49, %cst_16 [0] : vector<2x8x128xf32> to vector<8x128xf32>
    %51 = arith.addf %0, %50 : vector<8x128xf32>
    %52 = vector.shape_cast %6 : vector<16x128xf32> to vector<2x8x128xf32>
    %cst_17 = arith.constant dense<0.000000e+00> : vector<8x128xf32>
    %53 = vector.multi_reduction <add>, %52, %cst_17 [0] : vector<2x8x128xf32> to vector<8x128xf32>
    %54 = arith.addf %0, %53 : vector<8x128xf32>
    %55 = vector.shape_cast %44 : vector<16x128xf32> to vector<2x8x128xf32>
    %cst_18 = arith.constant dense<0.000000e+00> : vector<8x128xf32>
    %56 = vector.multi_reduction <add>, %55, %cst_18 [0] : vector<2x8x128xf32> to vector<8x128xf32>
    %57 = arith.addf %0, %56 : vector<8x128xf32>
    %c1_i32 = arith.constant 1 : i32
    %c0_19 = arith.constant 0 : index
    %c0_20 = arith.constant 0 : index
    %c0_21 = arith.constant 0 : index
    %c0_22 = arith.constant 0 : index
    %58 = vector.load %arg3[%c0_19, %c0_20, %c0_21, %c0_22] : memref<1x4x8x128xf32, #tpu.memory_space<vmem>>, vector<1x1x8x128xf32>
    %59 = vector.shape_cast %58 : vector<1x1x8x128xf32> to vector<8x128xf32>
    %60 = vector.shape_cast %48 : vector<8x128xf32> to vector<1x1x8x128xf32>
    tpu.vector_store %arg3[%c0_19, %c0_20, %c0_21, %c0_22], %60 {strides = array<i32>} : memref<1x4x8x128xf32, #tpu.memory_space<vmem>>, vector<1x1x8x128xf32>,
    %c0_23 = arith.constant 0 : index
    %c1 = arith.constant 1 : index
    %c0_24 = arith.constant 0 : index
    %c0_25 = arith.constant 0 : index
    %61 = vector.load %arg3[%c0_23, %c1, %c0_24, %c0_25] : memref<1x4x8x128xf32, #tpu.memory_space<vmem>>, vector<1x1x8x128xf32>
    %62 = vector.shape_cast %61 : vector<1x1x8x128xf32> to vector<8x128xf32>
    %63 = vector.shape_cast %51 : vector<8x128xf32> to vector<1x1x8x128xf32>
    tpu.vector_store %arg3[%c0_23, %c1, %c0_24, %c0_25], %63 {strides = array<i32>} : memref<1x4x8x128xf32, #tpu.memory_space<vmem>>, vector<1x1x8x128xf32>,
    %c0_26 = arith.constant 0 : index
    %c2 = arith.constant 2 : index
    %c0_27 = arith.constant 0 : index
    %c0_28 = arith.constant 0 : index
    %64 = vector.load %arg3[%c0_26, %c2, %c0_27, %c0_28] : memref<1x4x8x128xf32, #tpu.memory_space<vmem>>, vector<1x1x8x128xf32>
    %65 = vector.shape_cast %64 : vector<1x1x8x128xf32> to vector<8x128xf32>
    %66 = vector.shape_cast %54 : vector<8x128xf32> to vector<1x1x8x128xf32>
    tpu.vector_store %arg3[%c0_26, %c2, %c0_27, %c0_28], %66 {strides = array<i32>} : memref<1x4x8x128xf32, #tpu.memory_space<vmem>>, vector<1x1x8x128xf32>,
    %c0_29 = arith.constant 0 : index
    %c3 = arith.constant 3 : index
    %c0_30 = arith.constant 0 : index
    %c0_31 = arith.constant 0 : index
    %67 = vector.load %arg3[%c0_29, %c3, %c0_30, %c0_31] : memref<1x4x8x128xf32, #tpu.memory_space<vmem>>, vector<1x1x8x128xf32>
    %68 = vector.shape_cast %67 : vector<1x1x8x128xf32> to vector<8x128xf32>
    %69 = vector.shape_cast %57 : vector<8x128xf32> to vector<1x1x8x128xf32>
    tpu.vector_store %arg3[%c0_29, %c3, %c0_30, %c0_31], %69 {strides = array<i32>} : memref<1x4x8x128xf32, #tpu.memory_space<vmem>>, vector<1x1x8x128xf32>,
    return
  }
  func.func @transform_0(%arg0: i32) -> (i32, i32) {
    %c0_i32 = arith.constant 0 : i32
    %c0_i32_0 = arith.constant 0 : i32
    return %arg0, %c0_i32 : i32, i32
  }
  func.func @transform_1(%arg0: i32) -> (i32, i32) {
    %c0_i32 = arith.constant 0 : i32
    %c0_i32_0 = arith.constant 0 : i32
    return %arg0, %c0_i32 : i32, i32
  }
  func.func @transform_2(%arg0: i32) -> (i32, i32, i32, i32) {
    %c0_i32 = arith.constant 0 : i32
    %c0_i32_0 = arith.constant 0 : i32
    %c0_i32_1 = arith.constant 0 : i32
    %c0_i32_2 = arith.constant 0 : i32
    return %arg0, %c0_i32, %c0_i32_0, %c0_i32_1 : i32, i32, i32, i32
  }
}

</mosaic_0001>

<llo_original>
// kernel: tpu_custom_call.1
$region0: #{tpu_custom_call.1}
  #allocation0 [shape = 'u32[]', space=smem, size = 0x4, offset = 0x4, fixed_abs, tag = 'smem constant byte address 0x4 - core index']
  #allocation1 [shape = 'u32[144,128]{1,0:T(1,128)}', space=vmem, size = 0x12000, scoped, tag = 'internal scratch']
  %s0 = inlined_call_operand.hbm [shape: f32[16,128], index: 0, kind: input, shape index: {}]
  %s1 = inlined_call_operand.hbm [shape: f32[16,128], index: 1, kind: input, shape index: {}]
  %s2 = inlined_call_operand.hbm [shape: f32[1,4,8,128], index: 2, kind: output, shape index: {}]
  %s3 = sld [smem:[#allocation0]]
  $region26: #{tpu_custom_call.1} parent=0
    _
  %s5 = ssub.s32 1, %s3
  %s6 = scalar_select 0, %s5, %s3
  $region1: #{tpu_custom_call.1} parent=0
    #allocation2 [shape = 'u8[8192]{0}', space=vmem, size = 0x2000, scoped, tag = 'input window, operand 0, single buffered']
    #allocation3 [shape = 's32[1]{0}', space=sflag, size = 0x4, scoped, tag = 'scoped memory for tpu_custom_call.1']
    #allocation4 [shape = 's32[1]{0}', space=sflag, size = 0x4, scoped, tag = 'scoped memory for tpu_custom_call.1']
    #allocation5 [shape = 'u8[8192]{0}', space=vmem, size = 0x2000, scoped, tag = 'input window, operand 1, single buffered']
    #allocation6 [shape = 's32[1]{0}', space=sflag, size = 0x4, scoped, tag = 'scoped memory for tpu_custom_call.1']
    #allocation7 [shape = 'u8[16384]{0}', space=vmem, size = 0x4000, scoped, tag = 'output window, operand 0, single buffered']
    %7 = vsyncpa [#allocation3], 0
    %8 = vsyncpa [#allocation6], 0
    %9 = vsyncpa [#allocation4], 0
    // Predicated region
    $region2: #{tpu_custom_call.1} parent=1 // pred_check
      _
    $region3: #{tpu_custom_call.1} parent=1 // pred_check_branch
      %11 = sbr.rel (0) target = $region5
    $region4: #{tpu_custom_call.1} parent=1 // pred_region
      %s13 = ssub.s32 256, 256
      %14 = vsyncadd [#allocation3], %s13
      %s15 = sshll.u32 [#allocation2], 4
      %s16 = int_to_ptr.vmem [resolvable:$true] %s15
      %21 = dma.hbm_to_vmem [thread:$0]  %s0, 256, %s16, [#allocation3], 128, 128, 8
    $region5: #{tpu_custom_call.1} parent=1 // pred_fallthru
      _
    // Predicated region
    $region6: #{tpu_custom_call.1} parent=1 // pred_check
      _
    $region7: #{tpu_custom_call.1} parent=1 // pred_check_branch
      %23 = sbr.rel (0) target = $region9
    $region8: #{tpu_custom_call.1} parent=1 // pred_region
      %s25 = ssub.s32 256, 256
      %26 = vsyncadd [#allocation6], %s25
      %s27 = sshll.u32 [#allocation5], 4
      %s28 = int_to_ptr.vmem [resolvable:$true] %s27
      %33 = dma.hbm_to_vmem [thread:$0]  %s1, 256, %s28, [#allocation6], 128, 128, 8
    $region9: #{tpu_custom_call.1} parent=1 // pred_fallthru
      _
    // Predicated region
    $region10: #{tpu_custom_call.1} parent=1 // pred_check
      _
    $region11: #{tpu_custom_call.1} parent=1 // pred_check_branch
      %35 = sbr.rel (0) target = $region13
    $region12: #{tpu_custom_call.1} parent=1 // pred_region
      %36 = dma.done [#allocation3], 256
    $region13: #{tpu_custom_call.1} parent=1 // pred_fallthru
      _
    // Predicated region
    $region14: #{tpu_custom_call.1} parent=1 // pred_check
      _
    $region15: #{tpu_custom_call.1} parent=1 // pred_check_branch
      %38 = sbr.rel (0) target = $region17
    $region16: #{tpu_custom_call.1} parent=1 // pred_region
      %39 = dma.done [#allocation6], 256
    $region17: #{tpu_custom_call.1} parent=1 // pred_fallthru
      _
    %v40 = vld [vmem:[#allocation2] sm:$0xff]
    %v41 = vld [vmem:[#allocation2 + $0x8] sm:$0xff]
    %v42 = vld [vmem:[#allocation5] sm:$0xff]
    %v43 = vld [vmem:[#allocation5 + $0x8] sm:$0xff]
    %v44 = vand.u32 2147483647, %v40
    %v45 = vand.u32 2147483647, %v41
    %v46 = vsub.f32 0.0, %v44
    %v47 = vsub.f32 0.0, %v45
    %v48 = vmul.f32 %v46, 1.442695
    %v49 = vpow.pop %v48
    %v50 = vmul.f32 %v47, 1.442695
    %v51 = vpow.pop %v50
    %v52 = vadd.f32 %v49, 1.0
    %v53 = vadd.f32 %v51, 1.0
    %v54 = vrcp.pop %v52
    %v55 = vmul.f32 1.0, %v54
    %v56 = vrcp.pop %v53
    %v57 = vmul.f32 1.0, %v56
    %v58 = vlog2.pop %v52
    %v59 = vmul.f32 %v58, 0.6931472
    %v60 = vlog2.pop %v53
    %v61 = vmul.f32 %v60, 0.6931472
    %vm62 = vcmp.ge.f32.partialorder %v40, 0.0
    %vm63 = vcmp.ge.f32.partialorder %v41, 0.0
    %v64 = vmul.f32 %v49, %v55
    %v65 = vmul.f32 %v51, %v57
    %v66 = vsel %vm62, %v55, %v64
    %v67 = vsel %vm63, %v57, %v65
    %v68 = vsub.f32 0.0, %v40
    %v69 = vsub.f32 0.0, %v41
    %v70 = vmax.f32 %v68, 0.0
    %v71 = vmax.f32 %v69, 0.0
    %v72 = vadd.f32 %v59, %v70
    %v73 = vadd.f32 %v61, %v71
    %v74 = vsub.f32 0.0, %v72
    %v75 = vsub.f32 0.0, %v73
    %v76 = vmax.f32 %v74, -100.0
    %v77 = vmax.f32 %v75, -100.0
    %v78 = vmax.f32 %v40, 0.0
    %v79 = vmax.f32 %v41, 0.0
    %v80 = vadd.f32 %v59, %v78
    %v81 = vadd.f32 %v61, %v79
    %v82 = vsub.f32 0.0, %v80
    %v83 = vsub.f32 0.0, %v81
    %v84 = vmax.f32 %v82, -100.0
    %v85 = vmax.f32 %v83, -100.0
    %v86 = vmul.f32 %v42, %v76
    %v87 = vmul.f32 %v43, %v77
    %v88 = vsub.f32 1.0, %v42
    %v89 = vsub.f32 1.0, %v43
    %v90 = vmul.f32 %v88, %v84
    %v91 = vmul.f32 %v89, %v85
    %v92 = vadd.f32 %v86, %v90
    %v93 = vadd.f32 %v87, %v91
    %v94 = vsub.f32 0.0, %v92
    %v95 = vsub.f32 0.0, %v93
    %v96 = vmul.f32 %v66, %v42
    %v97 = vmul.f32 %v67, %v43
    %v98 = vadd.f32 %v96, %v97
    %v99 = vadd.f32 %v98, 0.0
    %v100 = vadd.f32 %v66, %v67
    %v101 = vadd.f32 %v100, 0.0
    %v102 = vadd.f32 %v42, %v43
    %v103 = vadd.f32 %v102, 0.0
    %v104 = vadd.f32 %v94, %v95
    %v105 = vadd.f32 %v104, 0.0
    %106 = vst [vmem:[#allocation7] sm:$0xff] %v99
    %s107 = scalar_lea.vmem [#allocation7], 8
    %108 = vst [vmem:[%s107] sm:$0xff] %v101
    %s109 = scalar_lea.vmem [#allocation7], 16
    %110 = vst [vmem:[%s109] sm:$0xff] %v103
    %s111 = scalar_lea.vmem [#allocation7], 24
    %112 = vst [vmem:[%s111] sm:$0xff] %v105
    // Predicated region
    $region18: #{tpu_custom_call.1} parent=1 // pred_check
      _
    $region19: #{tpu_custom_call.1} parent=1 // pred_check_branch
      %114 = sbr.rel (0) target = $region21
    $region20: #{tpu_custom_call.1} parent=1 // pred_region
      %s116 = ssub.s32 512, 512
      %117 = vsyncadd [#allocation4], %s116
      %s118 = sshll.u32 [#allocation7], 4
      %s119 = int_to_ptr.vmem [resolvable:$true] %s118
      %124 = dma.vmem_to_hbm [thread:$0]  %s119, 512, %s2, [#allocation4], 128, 128, 8
    $region21: #{tpu_custom_call.1} parent=1 // pred_fallthru
      _
    // Predicated region
    $region22: #{tpu_custom_call.1} parent=1 // pred_check
      _
    $region23: #{tpu_custom_call.1} parent=1 // pred_check_branch
      %126 = sbr.rel (0) target = $region25
    $region24: #{tpu_custom_call.1} parent=1 // pred_region
      %127 = dma.done [#allocation4], 512
    $region25: #{tpu_custom_call.1} parent=1 // pred_fallthru
      _
    %128 = vsyncpa [#allocation3], 1
    %129 = vsyncpa [#allocation6], 1
    %130 = vsyncpa [#allocation4], 1

</llo_original>
